<compile_context>
chip_gen: v6e
topology: v6e:2x2x1
jax: 0.10.0
libtpu: 0.0.40
codegen_flags: <defaults>
</compile_context>

<pallas_src>
import jax
import jax.numpy as jnp
from jax.experimental import pallas as pl
from jax.experimental.pallas import tpu as pltpu


def _swish_kernel(x_ref, o_ref):
    x = x_ref[...]
    # SiLU / Swish: x * sigmoid(x). Compute in f32 for accuracy (and because
    # v5e has no bf16 VPU/EUP), cast back to the I/O dtype.
    xf = x.astype(jnp.float32)
    o_ref[...] = (xf * jax.nn.sigmoid(xf)).astype(o_ref.dtype)


_LANE_CANDIDATES = (1024, 512, 256, 128)   # widest lane-dense last dim first


def _generation_config():
    """Return (block_bytes, vmem_limit_bytes, use_core_parallel) per TPU gen.

    v7x : 3.2 TB/s HBM -> a 2 MiB step is only ~1.25 us of HBM time, so the
          ~0.35 us fixed per-step cost is ~20-25%.  Use ~8 MiB blocks; the
          4 x 8 MiB double-buffered footprint needs vmem_limit_bytes above the
          32 MiB scoped default.
    v6e : 1.4 TB/s -> ~4 MiB blocks (16 MiB footprint, under the 32 MiB scoped
          default, no flag needed).
    v5e : ~820 GB/s, 16 MiB scoped default -> keep 2 MiB blocks (8 MiB
          footprint); per-step overhead is already <7%.
    """
    kind = ""
    try:
        kind = jax.devices()[0].device_kind.lower()
    except Exception:
        pass
    if "v7" in kind:
        return 8 << 20, 48 << 20, True
    if "v6" in kind:
        return 4 << 20, None, False
    if "v5" in kind:
        return 2 << 20, None, False
    return 2 << 20, None, False   # unknown chip: conservative default


def _compiler_params(dim_sem, vmem_limit_bytes):
    kwargs = dict(dimension_semantics=dim_sem)
    if vmem_limit_bytes is not None:
        kwargs["vmem_limit_bytes"] = vmem_limit_bytes
    return pltpu.CompilerParams(**kwargs)


def _launch(x_arr, block_shape, n_elems, itemsize, vmem_limit_bytes,
            use_core_parallel):
    """Run the elementwise kernel over x_arr with a 1-D grid along axis 0."""
    grid = (pl.cdiv(x_arr.shape[0], block_shape[0]),)
    if len(block_shape) == 1:
        index_map = lambda i: (i,)
    else:
        index_map = lambda i: (i, 0)

    def call(dim_sem):
        return pl.pallas_call(
            _swish_kernel,
            out_shape=jax.ShapeDtypeStruct(x_arr.shape, x_arr.dtype),
            grid=grid,
            in_specs=[pl.BlockSpec(block_shape, index_map)],
            out_specs=pl.BlockSpec(block_shape, index_map),
            compiler_params=_compiler_params(dim_sem, vmem_limit_bytes),
            cost_estimate=pl.CostEstimate(
                flops=5 * n_elems,
                transcendentals=n_elems,               # exp inside sigmoid
                bytes_accessed=2 * n_elems * itemsize,  # read + write
            ),
        )(x_arr)

    if use_core_parallel:
        # v7x: split the 1-D grid across both TensorCores so both sets of DMA
        # engines feed HBM.  Fall back gracefully if this lowering rejects it.
        try:
            return call((pltpu.CORE_PARALLEL,))
        except Exception:
            pass
    return call(("parallel",))


def swish(x):
    """Elementwise Swish on an arbitrary-shaped array via a Pallas TPU kernel."""
    orig_shape = x.shape
    orig_dtype = x.dtype
    n = x.size
    if n == 0:
        return x   # nothing to do; avoids a zero-size block / grid

    itemsize = jnp.dtype(orig_dtype).itemsize
    block_bytes, vmem_limit_bytes, use_core_parallel = _generation_config()

    # Flat view; for a default-layout (contiguous) array this reshape is
    # layout-preserving (no copy).
    x_flat = x.reshape(-1)

    if n % 128 == 0:
        # Fast path: lane-dense 2-D view -> unmasked vst's, full-width lanes.
        for lane in _LANE_CANDIDATES:
            if n % lane == 0:
                break
        rows = n // lane
        # Generation-tuned block: big enough to amortize the ~0.35 us per-step
        # overhead, small enough that the double-buffered in+out footprint
        # fits that generation's scoped VMEM budget (see _generation_config).
        target_rows = max(8, block_bytes // (lane * itemsize))
        tile_rows = rows if rows <= target_rows else target_rows
        out = _launch(x_flat.reshape(rows, lane), (tile_rows, lane),
                      n, itemsize, vmem_limit_bytes, use_core_parallel)
    else:
        # Ragged path: 1-D grid straight over the flat array; Pallas masks the
        # partial last block. No whole-array pad / slice round-trips.
        block = max(128, min(block_bytes // itemsize, pl.cdiv(n, 128) * 128))
        out = _launch(x_flat, (block,), n, itemsize, vmem_limit_bytes,
                      use_core_parallel)

    return out.reshape(orig_shape)


if __name__ == "__main__":
    key = jax.random.PRNGKey(0)

    # Small NCHW input consistent with typical conv-net usage of Swish.
    x = jax.random.normal(key, (2, 4, 16, 16), dtype=jnp.float32)
    y = jax.block_until_ready(swish(x))
    y_ref = x * jax.nn.sigmoid(x)
    assert y.shape == x.shape and y.dtype == x.dtype
    assert jnp.max(jnp.abs(y - y_ref)) < 1e-5

    # Ragged-size input: exercises the masked 1-D path (no pad/slice passes).
    x2 = jax.random.normal(jax.random.PRNGKey(1), (3, 5, 7), dtype=jnp.float32)
    y2 = jax.block_until_ready(swish(x2))
    y2_ref = x2 * jax.nn.sigmoid(x2)
    assert y2.shape == x2.shape and y2.dtype == x2.dtype
    assert jnp.max(jnp.abs(y2 - y2_ref)) < 1e-5

    # Medium input to exercise a multi-step grid on the 2-D fast path.
    x3 = jax.random.normal(jax.random.PRNGKey(2), (4, 16, 128, 128),
                           dtype=jnp.float32)
    y3 = jax.block_until_ready(swish(x3))
    y3_ref = x3 * jax.nn.sigmoid(x3)
    assert y3.shape == x3.shape and y3.dtype == x3.dtype
    assert jnp.max(jnp.abs(y3 - y3_ref)) < 1e-5

    print("KERNEL_OK")
</pallas_src>

<mosaic_0001>
module attributes {stable_mosaic.version = 11 : i64} {
  func.func @_swish_kernel(%arg0: i32, %arg1: memref<2x1024xf32, #tpu.memory_space<vmem>>, %arg2: memref<2x1024xf32, #tpu.memory_space<vmem>>) attributes {dimension_semantics = [#tpu.dimension_semantics<parallel>], iteration_bounds = array<i64: 1>, scalar_prefetch = 0 : i64, scratch_operands = 0 : i64, tpu.core_type = #tpu.core_type<tc>, window_params = [{transform_indices = @transform_0, window_bounds = array<i64: 2, 1024>}, {transform_indices = @transform_1, window_bounds = array<i64: 2, 1024>}]} {
    %c0 = arith.constant 0 : index
    %c0_0 = arith.constant 0 : index
    %0 = vector.load %arg1[%c0, %c0_0] : memref<2x1024xf32, #tpu.memory_space<vmem>>, vector<2x1024xf32>
    %1 = arith.negf %0 : vector<2x1024xf32>
    %2 = math.exp %1 : vector<2x1024xf32>
    %cst = arith.constant 1.000000e+00 : f32
    %3 = vector.broadcast %cst : f32 to vector<2x1024xf32>
    %4 = arith.addf %3, %2 : vector<2x1024xf32>
    %5 = arith.divf %3, %4 : vector<2x1024xf32>
    %6 = arith.mulf %0, %5 : vector<2x1024xf32>
    %c0_1 = arith.constant 0 : index
    %c0_2 = arith.constant 0 : index
    %7 = vector.load %arg2[%c0_1, %c0_2] : memref<2x1024xf32, #tpu.memory_space<vmem>>, vector<2x1024xf32>
    tpu.vector_store %arg2[%c0_1, %c0_2], %6 {strides = array<i32>} : memref<2x1024xf32, #tpu.memory_space<vmem>>, vector<2x1024xf32>,
    return
  }
  func.func @transform_0(%arg0: i32) -> (i32, i32) {
    %c0_i32 = arith.constant 0 : i32
    %c0_i32_0 = arith.constant 0 : i32
    return %arg0, %c0_i32 : i32, i32
  }
  func.func @transform_1(%arg0: i32) -> (i32, i32) {
    %c0_i32 = arith.constant 0 : i32
    %c0_i32_0 = arith.constant 0 : i32
    return %arg0, %c0_i32 : i32, i32
  }
}

</mosaic_0001>

<llo_original>
// kernel: tpu_custom_call.1
$region0: #{tpu_custom_call.1}
  #allocation0 [shape = 'u32[]', space=smem, size = 0x4, offset = 0x4, fixed_abs, tag = 'smem constant byte address 0x4 - core index']
  #allocation1 [shape = 'u32[144,128]{1,0:T(1,128)}', space=vmem, size = 0x12000, scoped, tag = 'internal scratch']
  %s0 = inlined_call_operand.hbm [shape: f32[2,1024], index: 0, kind: input, shape index: {}]
  %s1 = inlined_call_operand.hbm [shape: f32[2,1024], index: 1, kind: output, shape index: {}]
  %s2 = sld [smem:[#allocation0]]
  $region18: #{tpu_custom_call.1} parent=0
    _
  %s4 = ssub.s32 1, %s2
  %s5 = scalar_select 0, %s4, %s2
  $region1: #{tpu_custom_call.1} parent=0
    #allocation2 [shape = 'u8[8192]{0}', space=vmem, size = 0x2000, scoped, tag = 'input window, operand 0, single buffered']
    #allocation3 [shape = 's32[1]{0}', space=sflag, size = 0x4, scoped, tag = 'scoped memory for tpu_custom_call.1']
    #allocation4 [shape = 's32[1]{0}', space=sflag, size = 0x4, scoped, tag = 'scoped memory for tpu_custom_call.1']
    #allocation5 [shape = 'u8[8192]{0}', space=vmem, size = 0x2000, scoped, tag = 'output window, operand 0, single buffered']
    %6 = vsyncpa [#allocation3], 0
    %7 = vsyncpa [#allocation4], 0
    // Predicated region
    $region2: #{tpu_custom_call.1} parent=1 // pred_check
      _
    $region3: #{tpu_custom_call.1} parent=1 // pred_check_branch
      %9 = sbr.rel (0) target = $region5
    $region4: #{tpu_custom_call.1} parent=1 // pred_region
      %s11 = ssub.s32 256, 256
      %12 = vsyncadd [#allocation3], %s11
      %s14 = sshll.u32 [#allocation2], 4
      %s15 = int_to_ptr.vmem [resolvable:$true] %s14
      %17 = dma.hbm_to_vmem [thread:$0]  %s0, 256, %s15, [#allocation3]
    $region5: #{tpu_custom_call.1} parent=1 // pred_fallthru
      _
    // Predicated region
    $region6: #{tpu_custom_call.1} parent=1 // pred_check
      _
    $region7: #{tpu_custom_call.1} parent=1 // pred_check_branch
      %19 = sbr.rel (0) target = $region9
    $region8: #{tpu_custom_call.1} parent=1 // pred_region
      %20 = dma.done [#allocation3], 256
    $region9: #{tpu_custom_call.1} parent=1 // pred_fallthru
      _
    %v21 = vld [vmem:[#allocation2] sm:$0xff]
    %v22 = vld [vmem:[#allocation2 + $0x8] sm:$0xff]
    %v23 = vxor.u32 %v21, 2147483648
    %v24 = vxor.u32 %v22, 2147483648
    %v25 = vmul.f32 %v23, 1.442695
    %v26 = vpow.pop %v25
    %v27 = vmul.f32 %v24, 1.442695
    %v28 = vpow.pop %v27
    %v29 = vadd.f32 %v26, 1.0
    %v30 = vadd.f32 %v28, 1.0
    %v31 = vrcp.pop %v29
    %v32 = vmul.f32 1.0, %v31
    %v33 = vrcp.pop %v30
    %v34 = vmul.f32 1.0, %v33
    %v35 = vmul.f32 %v21, %v32
    %v36 = vmul.f32 %v22, %v34
    %37 = vst [vmem:[#allocation5] sm:$0xff] %v35
    %38 = vst [vmem:[#allocation5 + $0x8] sm:$0xff] %v36
    // Predicated region
    $region10: #{tpu_custom_call.1} parent=1 // pred_check
      _
    $region11: #{tpu_custom_call.1} parent=1 // pred_check_branch
      %40 = sbr.rel (0) target = $region13
    $region12: #{tpu_custom_call.1} parent=1 // pred_region
      %s42 = ssub.s32 256, 256
      %43 = vsyncadd [#allocation4], %s42
      %s45 = sshll.u32 [#allocation5], 4
      %s46 = int_to_ptr.vmem [resolvable:$true] %s45
      %48 = dma.vmem_to_hbm [thread:$0]  %s46, 256, %s1, [#allocation4]
    $region13: #{tpu_custom_call.1} parent=1 // pred_fallthru
      _
    // Predicated region
    $region14: #{tpu_custom_call.1} parent=1 // pred_check
      _
    $region15: #{tpu_custom_call.1} parent=1 // pred_check_branch
      %50 = sbr.rel (0) target = $region17
    $region16: #{tpu_custom_call.1} parent=1 // pred_region
      %51 = dma.done [#allocation4], 256
    $region17: #{tpu_custom_call.1} parent=1 // pred_fallthru
      _
    %52 = vsyncpa [#allocation3], 1
    %53 = vsyncpa [#allocation4], 1

</llo_original>
